<compile_context>
chip_gen: v7x
topology: tpu7x:2x2x1
jax: 0.10.0
libtpu: 0.0.40
codegen_flags: <defaults>
</compile_context>

<pallas_src>
import functools

import jax
import jax.numpy as jnp
from jax.experimental import pallas as pl
from jax.experimental.pallas import tpu as pltpu


def _round_up(n: int, m: int) -> int:
    return ((n + m - 1) // m) * m


_HAS_BUFFERED = hasattr(pl, "Buffered")


def _param_spec(block_shape, index_map):
    """BlockSpec for grid-constant params (weight/bias): single-buffer if supported."""
    if _HAS_BUFFERED:
        try:
            return pl.BlockSpec(block_shape, index_map, pipeline_mode=pl.Buffered(1))
        except TypeError:
            # Old JAX without the pipeline_mode kwarg -> default double-buffering.
            pass
    return pl.BlockSpec(block_shape, index_map)


def _vmem_limit_bytes() -> int:
    """Generation-aware scoped-VMEM budget: ~75% of physical, capped at 96 MiB."""
    cap = None
    try:
        cap = getattr(pltpu.get_tpu_info(), "vmem_capacity_bytes", None)
    except Exception:
        cap = None
    if not cap:
        cap = 64 * 2 ** 20  # conservative fallback: safe on every generation (v7x = 64 MiB/TC)
    return int(min(int(cap * 0.75), 96 * 2 ** 20))


def _skip_linear_kernel(x_ref, w_ref, b_ref, o_ref):
    # x_ref: (tm, H)  w_ref: (H, H)  b_ref: (1, H) f32  o_ref: (tm, H)
    x = x_ref[...]
    # MXU matmul with f32 accumulation.
    y = jnp.dot(x, w_ref[...], preferred_element_type=jnp.float32)
    # Residual + bias epilogue in f32, cast once to the output dtype.
    o_ref[...] = (x.astype(jnp.float32) + y + b_ref[...]).astype(o_ref.dtype)


def _skip_linear_coltile_kernel(x_ref, w_ref, b_ref, o_ref, *, tn):
    # x_ref: (tm, H)  w_ref: (H, tn)  b_ref: (1, tn) f32  o_ref: (tm, tn)
    j = pl.program_id(1)
    x = x_ref[...]
    y = jnp.dot(x, w_ref[...], preferred_element_type=jnp.float32)
    col0 = pl.multiple_of(j * tn, 128)           # H % tn == 0 guaranteed by wrapper
    x_cols = x_ref[:, pl.ds(col0, tn)]
    o_ref[...] = (x_cols.astype(jnp.float32) + y + b_ref[...]).astype(o_ref.dtype)


def skip_connection_linear(x, w, b):
    """SkipConnection(Linear): returns x + x @ w + b with x's shape and dtype.

    x: (B, S, H); w: (H, H) laid out so module(x) = x @ w + b; b: (H,).
    For best throughput pass x (and w) as bfloat16; accumulation is always f32.
    """
    B, S, H = x.shape
    M = B * S
    dtype = x.dtype
    itemsize = jnp.dtype(dtype).itemsize
    row_align = 16 if itemsize < 4 else 8        # bf16 packs 2 rows / sublane

    x2d = x.reshape(M, H)
    w = w.astype(dtype)                          # matmul operand dtype follows x
    b2d = b.astype(jnp.float32).reshape(1, H)    # bias kept f32 (tiny, exact add)

    vmem_limit = _vmem_limit_bytes()
    w_bufs = 1 if _HAS_BUFFERED else 2
    w_bytes = H * H * itemsize

    # --- column tiling of W only when it cannot comfortably stay VMEM-resident ---
    use_coltile = (w_bufs * w_bytes > vmem_limit // 3) and H > 128 and H % 128 == 0
    tn = H
    if use_coltile:
        for cand in (2048, 1024, 512, 256, 128):
            if H % cand == 0 and 2 * H * cand * itemsize <= vmem_limit // 3:
                tn = cand
                break
        use_coltile = tn < H

    # --- row tile: target ~2 MiB of x per tile, bounded by VMEM / M / megacore ---
    tm = _round_up(max(512, (2 * 2 ** 20) // (H * itemsize)), row_align)
    tm = min(tm, 8192)
    w_resident = (2 * H * tn * itemsize) if use_coltile else (w_bufs * w_bytes)
    out_cols = tn if use_coltile else H
    avail = vmem_limit - w_resident - 2 * H * 4 - (1 << 20)       # 1 MiB slack
    per_row = 2 * H * itemsize + 2 * out_cols * itemsize          # x + out, double-buffered
    tm_by_vmem = max(row_align, (avail // per_row) // row_align * row_align)
    tm = min(tm, tm_by_vmem)
    tm = min(tm, _round_up(M, row_align))                         # never larger than problem
    if M > row_align:
        # Keep >= 2 row steps so v7x's two TensorCores both get work.
        tm = min(tm, max(row_align, _round_up((M + 1) // 2, row_align)))
    tm = max(tm, row_align)

    n_row = pl.cdiv(M, tm)

    cost = pl.CostEstimate(
        flops=2 * M * H * H,
        transcendentals=0,
        bytes_accessed=2 * M * H * itemsize + w_bytes + H * 4,
    )

    if not use_coltile:
        grid = (n_row,)
        kernel = _skip_linear_kernel
        in_specs = [
            pl.BlockSpec((tm, H), lambda i: (i, 0)),     # x row tile (double-buffered)
            _param_spec((H, H), lambda i: (0, 0)),       # full weight, VMEM-resident
            _param_spec((1, H), lambda i: (0, 0)),       # bias row (f32)
        ]
        out_specs = pl.BlockSpec((tm, H), lambda i: (i, 0))
        dims = ("parallel",)
    else:
        grid = (n_row, H // tn)
        kernel = functools.partial(_skip_linear_coltile_kernel, tn=tn)
        in_specs = [
            pl.BlockSpec((tm, H), lambda i, j: (i, 0)),  # x tile reused across column steps
            pl.BlockSpec((H, tn), lambda i, j: (0, j)),  # weight column block
            pl.BlockSpec((1, tn), lambda i, j: (0, j)),  # bias column block
        ]
        out_specs = pl.BlockSpec((tm, tn), lambda i, j: (i, j))
        dims = ("parallel", "arbitrary")

    out = pl.pallas_call(
        kernel,
        out_shape=jax.ShapeDtypeStruct((M, H), dtype),
        grid_spec=pltpu.PrefetchScalarGridSpec(
            num_scalar_prefetch=0,
            grid=grid,
            in_specs=in_specs,
            out_specs=out_specs,
        ),
        compiler_params=pltpu.CompilerParams(
            dimension_semantics=dims,
            vmem_limit_bytes=vmem_limit,
        ),
        cost_estimate=cost,
    )(x2d, w, b2d)

    return out.reshape(B, S, H)


if __name__ == "__main__":
    B, S, H = 2, 8, 128   # small demo shapes: batch=2, seq=8, hidden=128

    key = jax.random.PRNGKey(0)
    kx, kw, kb = jax.random.split(key, 3)

    # bf16 activations/weights (memory-bound op -> half the HBM bytes);
    # accumulation, residual and bias add stay in f32 inside the kernel.
    x = jax.random.normal(kx, (B, S, H), dtype=jnp.float32).astype(jnp.bfloat16)
    w = (jax.random.normal(kw, (H, H), dtype=jnp.float32)
         * (1.0 / jnp.sqrt(H))).astype(jnp.bfloat16)
    b = jax.random.normal(kb, (H,), dtype=jnp.float32) * 0.01

    out = skip_connection_linear(x, w, b)
    jax.block_until_ready(out)

    # Reference (plain JAX, f32, same bf16-quantized params): input + module(input)
    xf = x.astype(jnp.float32)
    wf = w.astype(jnp.float32)
    ref = xf + (jnp.einsum("bsh,hk->bsk", xf, wf) + b)

    outf = out.astype(jnp.float32)
    assert out.shape == (B, S, H) and out.dtype == x.dtype
    assert jnp.allclose(outf, ref, atol=5e-2, rtol=5e-2), (
        f"mismatch vs reference: max abs err = {jnp.max(jnp.abs(outf - ref))}")

    print("KERNEL_OK")
</pallas_src>

<mosaic_0001>
module attributes {stable_mosaic.version = 11 : i64} {
  func.func @_skip_linear_kernel(%arg0: i32, %arg1: memref<16x128xbf16, #tpu.memory_space<vmem>>, %arg2: memref<128x128xbf16, #tpu.memory_space<vmem>>, %arg3: memref<1x128xf32, #tpu.memory_space<vmem>>, %arg4: memref<16x128xbf16, #tpu.memory_space<vmem>>) attributes {dimension_semantics = [#tpu.dimension_semantics<parallel>], iteration_bounds = array<i64: 1>, scalar_prefetch = 0 : i64, scratch_operands = 0 : i64, tpu.core_type = #tpu.core_type<tc>, window_params = [{transform_indices = @transform_0, window_bounds = array<i64: 16, 128>}, {pipeline_mode = #tpu.pipeline_mode<synchronous>, transform_indices = @transform_1, window_bounds = array<i64: 128, 128>}, {pipeline_mode = #tpu.pipeline_mode<synchronous>, transform_indices = @transform_2, window_bounds = array<i64: 1, 128>}, {transform_indices = @transform_3, window_bounds = array<i64: 16, 128>}]} {
    %c0 = arith.constant 0 : index
    %c0_0 = arith.constant 0 : index
    %0 = vector.load %arg1[%c0, %c0_0] : memref<16x128xbf16, #tpu.memory_space<vmem>>, vector<16x128xbf16>
    %c0_1 = arith.constant 0 : index
    %c0_2 = arith.constant 0 : index
    %1 = vector.load %arg2[%c0_1, %c0_2] : memref<128x128xbf16, #tpu.memory_space<vmem>>, vector<128x128xbf16>
    %cst = arith.constant dense<0.000000e+00> : vector<16x128xf32>
    %2 = tpu.matmul %0, %1, %cst {dimension_numbers = #tpu.dot_dimension_numbers<[1], [0], [0], [1], [0, 0, 1, 1], [], []>} : vector<16x128xbf16>, vector<128x128xbf16>, vector<16x128xf32> -> vector<16x128xf32>
    %3 = arith.extf %0 : vector<16x128xbf16> to vector<16x128xf32>
    %4 = arith.addf %3, %2 : vector<16x128xf32>
    %c0_3 = arith.constant 0 : index
    %c0_4 = arith.constant 0 : index
    %5 = vector.load %arg3[%c0_3, %c0_4] : memref<1x128xf32, #tpu.memory_space<vmem>>, vector<1x128xf32>
    %6 = vector.broadcast %5 : vector<1x128xf32> to vector<16x128xf32>
    %7 = arith.addf %4, %6 : vector<16x128xf32>
    %8 = arith.truncf %7 : vector<16x128xf32> to vector<16x128xbf16>
    %c0_5 = arith.constant 0 : index
    %c0_6 = arith.constant 0 : index
    %9 = vector.load %arg4[%c0_5, %c0_6] : memref<16x128xbf16, #tpu.memory_space<vmem>>, vector<16x128xbf16>
    tpu.vector_store %arg4[%c0_5, %c0_6], %8 {strides = array<i32>} : memref<16x128xbf16, #tpu.memory_space<vmem>>, vector<16x128xbf16>,
    return
  }
  func.func @transform_0(%arg0: i32) -> (i32, i32) {
    %c0_i32 = arith.constant 0 : i32
    %c0_i32_0 = arith.constant 0 : i32
    return %arg0, %c0_i32 : i32, i32
  }
  func.func @transform_1(%arg0: i32) -> (i32, i32) {
    %c0_i32 = arith.constant 0 : i32
    %c0_i32_0 = arith.constant 0 : i32
    %c0_i32_1 = arith.constant 0 : i32
    return %c0_i32, %c0_i32_0 : i32, i32
  }
  func.func @transform_2(%arg0: i32) -> (i32, i32) {
    %c0_i32 = arith.constant 0 : i32
    %c0_i32_0 = arith.constant 0 : i32
    %c0_i32_1 = arith.constant 0 : i32
    return %c0_i32, %c0_i32_0 : i32, i32
  }
  func.func @transform_3(%arg0: i32) -> (i32, i32) {
    %c0_i32 = arith.constant 0 : i32
    %c0_i32_0 = arith.constant 0 : i32
    return %arg0, %c0_i32 : i32, i32
  }
}

</mosaic_0001>

<llo_original>
// kernel: tpu_custom_call.1
$region0: #{tpu_custom_call.1}
  #allocation0 [shape = 'u32[]', space=smem, size = 0x4, offset = 0x4, fixed_abs, tag = 'smem constant byte address 0x4 - core index']
  #allocation1 [shape = 'u32[144,128]{1,0:T(1,128)}', space=vmem, size = 0x12000, scoped, tag = 'internal scratch']
  %s0 = inlined_call_operand.hbm [shape: bf16[16,128], index: 0, kind: input, shape index: {}]
  %s1 = inlined_call_operand.hbm [shape: bf16[128,128], index: 1, kind: input, shape index: {}]
  %s2 = inlined_call_operand.vmem [shape: f32[1,128], index: 2, kind: input, shape index: {}]
  %s3 = inlined_call_operand.hbm [shape: bf16[16,128], index: 3, kind: output, shape index: {}]
  %s4 = sld [smem:[#allocation0]]
  $region30: #{tpu_custom_call.1} parent=0
    _
  %s6 = ssub.s32 1, %s4
  %s7 = scalar_select 0, %s6, %s4
  $region1: #{tpu_custom_call.1} parent=0
    #allocation2 [shape = 'u8[4096]{0}', space=vmem, size = 0x1000, scoped, tag = 'input window, operand 0, single buffered']
    #allocation3 [shape = 's32[1]{0}', space=sflag, size = 0x4, scoped, tag = 'scoped memory for tpu_custom_call.1']
    #allocation4 [shape = 's32[1]{0}', space=sflag, size = 0x4, scoped, tag = 'scoped memory for tpu_custom_call.1']
    #allocation5 [shape = 'u8[32768]{0}', space=vmem, size = 0x8000, scoped, tag = 'input window, operand 1, single buffered']
    #allocation6 [shape = 's32[1]{0}', space=sflag, size = 0x4, scoped, tag = 'scoped memory for tpu_custom_call.1']
    #allocation7 [shape = 'u8[4096]{0}', space=vmem, size = 0x1000, scoped, tag = 'output window, operand 0, single buffered']
    %8 = vsyncpa [#allocation3], 0
    %9 = vsyncpa [#allocation6], 0
    %10 = vsyncpa [#allocation4], 0
    // Predicated region
    $region2: #{tpu_custom_call.1} parent=1 // pred_check
      _
    $region3: #{tpu_custom_call.1} parent=1 // pred_check_branch
      %12 = sbr.rel (0) target = $region5
    $region4: #{tpu_custom_call.1} parent=1 // pred_region
      %s14 = ssub.s32 128, 128
      %15 = vsyncadd [#allocation3], %s14
      %s16 = sshll.u32 [#allocation2], 4
      %s17 = int_to_ptr.vmem [resolvable:$true] %s16
      %22 = dma.hbm_to_vmem [thread:$0]  %s0, 128, %s17, [#allocation3], 64, 64, 4
    $region5: #{tpu_custom_call.1} parent=1 // pred_fallthru
      _
    // Predicated region
    $region6: #{tpu_custom_call.1} parent=1 // pred_check
      _
    $region7: #{tpu_custom_call.1} parent=1 // pred_check_branch
      %24 = sbr.rel (0) target = $region9
    $region8: #{tpu_custom_call.1} parent=1 // pred_region
      %s26 = ssub.s32 1024, 1024
      %27 = vsyncadd [#allocation6], %s26
      %s28 = sshll.u32 [#allocation5], 4
      %s29 = int_to_ptr.vmem [resolvable:$true] %s28
      %34 = dma.hbm_to_vmem [thread:$0]  %s1, 1024, %s29, [#allocation6], 64, 64, 4
    $region9: #{tpu_custom_call.1} parent=1 // pred_fallthru
      _
    // Predicated region
    $region10: #{tpu_custom_call.1} parent=1 // pred_check
      _
    $region11: #{tpu_custom_call.1} parent=1 // pred_check_branch
      %36 = sbr.rel (0) target = $region13
    $region12: #{tpu_custom_call.1} parent=1 // pred_region
      _
    $region13: #{tpu_custom_call.1} parent=1 // pred_fallthru
      _
    // Predicated region
    $region14: #{tpu_custom_call.1} parent=1 // pred_check
      _
    $region15: #{tpu_custom_call.1} parent=1 // pred_check_branch
      %38 = sbr.rel (0) target = $region17
    $region16: #{tpu_custom_call.1} parent=1 // pred_region
      %39 = dma.done [#allocation3], 128
    $region17: #{tpu_custom_call.1} parent=1 // pred_fallthru
      _
    // Predicated region
    $region18: #{tpu_custom_call.1} parent=1 // pred_check
      _
    $region19: #{tpu_custom_call.1} parent=1 // pred_check_branch
      %41 = sbr.rel (0) target = $region21
    $region20: #{tpu_custom_call.1} parent=1 // pred_region
      %42 = dma.done [#allocation6], 1024
    $region21: #{tpu_custom_call.1} parent=1 // pred_fallthru
      _
    %v44 = vld [vmem:[#allocation2] sm:$0xf]
    %v45 = vld [vmem:[#allocation2 + $0x4] sm:$0xf]
    %v46 = vld [vmem:[#allocation5] sm:$0xf]
    %v47 = vld [vmem:[#allocation5 + $0x4] sm:$0xf]
    %v48 = vld [vmem:[#allocation5 + $0x8] sm:$0xf]
    %v49 = vld [vmem:[#allocation5 + $0xc] sm:$0xf]
    %v50 = vld [vmem:[#allocation5 + $0x10] sm:$0xf]
    %v51 = vld [vmem:[#allocation5 + $0x14] sm:$0xf]
    %v52 = vld [vmem:[#allocation5 + $0x18] sm:$0xf]
    %v53 = vld [vmem:[#allocation5 + $0x1c] sm:$0xf]
    %v54 = vld [vmem:[#allocation5 + $0x20] sm:$0xf]
    %v55 = vld [vmem:[#allocation5 + $0x24] sm:$0xf]
    %v56 = vld [vmem:[#allocation5 + $0x28] sm:$0xf]
    %v57 = vld [vmem:[#allocation5 + $0x2c] sm:$0xf]
    %v58 = vld [vmem:[#allocation5 + $0x30] sm:$0xf]
    %v59 = vld [vmem:[#allocation5 + $0x34] sm:$0xf]
    %v60 = vld [vmem:[#allocation5 + $0x38] sm:$0xf]
    %v61 = vld [vmem:[#allocation5 + $0x3c] sm:$0xf]
    %v64 = vunpack.c.l.b16 %v44
    %v65 = vunpack.c.l.b16 %v45
    %v66 = vpack.c.b16 %v65, %v64
    %v84 = vunpack.c.l.b16 %v46
    %v85 = vunpack.c.l.b16 %v47
    %v86 = vunpack.c.l.b16 %v48
    %v87 = vunpack.c.l.b16 %v49
    %v88 = vunpack.c.l.b16 %v50
    %v89 = vunpack.c.l.b16 %v51
    %v90 = vunpack.c.l.b16 %v52
    %v91 = vunpack.c.l.b16 %v53
    %v92 = vunpack.c.l.b16 %v54
    %v93 = vunpack.c.l.b16 %v55
    %v94 = vunpack.c.l.b16 %v56
    %v95 = vunpack.c.l.b16 %v57
    %v96 = vunpack.c.l.b16 %v58
    %v97 = vunpack.c.l.b16 %v59
    %v98 = vunpack.c.l.b16 %v60
    %v99 = vunpack.c.l.b16 %v61
    %v100 = vpack.c.b16 %v85, %v84
    %v101 = vpack.c.b16 %v87, %v86
    %v102 = vpack.c.b16 %v89, %v88
    %v103 = vpack.c.b16 %v91, %v90
    %v104 = vpack.c.b16 %v93, %v92
    %v105 = vpack.c.b16 %v95, %v94
    %v106 = vpack.c.b16 %v97, %v96
    %v107 = vpack.c.b16 %v99, %v98
    %116 = vmatprep.subr.bf16.mxu0 0
    %117 = vmatpush1.bf16.msra.mxu0 %v100
    %118 = vmatprep.subr.bf16.mxu0 0
    %119 = vmatpush1.bf16.msra.mxu0 %v101
    %120 = vmatprep.subr.bf16.mxu0 0
    %121 = vmatpush1.bf16.msra.mxu0 %v102
    %122 = vmatprep.subr.bf16.mxu0 0
    %123 = vmatpush1.bf16.msra.mxu0 %v103
    %124 = vmatprep.subr.bf16.mxu0 0
    %125 = vmatpush1.bf16.msra.mxu0 %v104
    %126 = vmatprep.subr.bf16.mxu0 0
    %127 = vmatpush1.bf16.msra.mxu0 %v105
    %128 = vmatprep.subr.bf16.mxu0 0
    %129 = vmatpush1.bf16.msra.mxu0 %v106
    %130 = vmatprep.subr.bf16.mxu0 0
    %131 = vmatpush1.bf16.msra.mxu0 %v107
    %132 = vmatprep.subr.bf16.mxu0 0
    %133 = vmatpush1.bf16.msra.mxu0 0
    %134 = vmatprep.subr.bf16.mxu0 0
    %135 = vmatpush1.bf16.msra.mxu0 0
    %136 = vmatprep.subr.bf16.mxu0 0
    %137 = vmatpush1.bf16.msra.mxu0 0
    %138 = vmatprep.subr.bf16.mxu0 0
    %139 = vmatpush1.bf16.msra.mxu0 0
    %140 = vmatprep.subr.bf16.mxu0 0
    %141 = vmatpush1.bf16.msra.mxu0 0
    %142 = vmatprep.subr.bf16.mxu0 0
    %143 = vmatpush1.bf16.msra.mxu0 0
    %144 = vmatprep.subr.bf16.mxu0 0
    %145 = vmatpush1.bf16.msra.mxu0 0
    %146 = vmatprep.subr.bf16.mxu0 0
    %147 = vmatpush1.bf16.msra.mxu0 0
    %148 = vmatprep.mubr.bf16.mxu0 0
    %149 = vmatmul.mubr.bf16.gmra.mrb[0].mxu0 %v66
    %v150 = vpop.f32.mrb[0].mxu0
    %v151 = vadd.f32 0.0, %v150
    %v152 = vpop.f32.mrb[0].mxu0
    %v153 = vpop.f32.mrb[0].mxu0
    %v154 = vadd.f32 0.0, %v153
    %v155 = vpop.f32.mrb[0].mxu0
    %156 = vdwg.mxu0
    %v157 = vunpack.c.l.bf16 %v44
    %v158 = vunpack.c.l.bf16 %v45
    %v159 = vadd.f32 %v157, %v151
    %v160 = vadd.f32 %v158, %v154
    %v161 = vld [vmem:[%s2] sm:$0x1]
    %v163 = vlaneseq
    %v164 = vshrl.u32 %v163, 7
    %v165 = vsub.s32 0, %v164
    %v166 = vrot.slane %v161, %v165
    %v168 = vadd.f32 %v159, %v166
    %v169 = vadd.f32 %v160, %v166
    %v170 = vpack.c.bf16 %v169, %v168
    %v172 = vunpack.c.l.b16 %v170
    %v173 = vunpack.c.h.b16 %v170
    %v174 = vpack.c.b16 %v172, %v172
    %v175 = vpack.c.b16 %v173, %v173
    %178 = vst [vmem:[#allocation7] sm:$0xf] %v174
    %179 = vst [vmem:[#allocation7 + $0x4] sm:$0xf] %v175
    // Predicated region
    $region22: #{tpu_custom_call.1} parent=1 // pred_check
      _
    $region23: #{tpu_custom_call.1} parent=1 // pred_check_branch
      %181 = sbr.rel (0) target = $region25
    $region24: #{tpu_custom_call.1} parent=1 // pred_region
      %s183 = ssub.s32 128, 128
      %184 = vsyncadd [#allocation4], %s183
      %s185 = sshll.u32 [#allocation7], 4
      %s186 = int_to_ptr.vmem [resolvable:$true] %s185
      %191 = dma.vmem_to_hbm [thread:$0]  %s186, 128, %s3, [#allocation4], 64, 64, 4
    $region25: #{tpu_custom_call.1} parent=1 // pred_fallthru
      _
    // Predicated region
    $region26: #{tpu_custom_call.1} parent=1 // pred_check
      _
    $region27: #{tpu_custom_call.1} parent=1 // pred_check_branch
      %193 = sbr.rel (0) target = $region29
    $region28: #{tpu_custom_call.1} parent=1 // pred_region
      %194 = dma.done [#allocation4], 128
    $region29: #{tpu_custom_call.1} parent=1 // pred_fallthru
      _
    %195 = vsyncpa [#allocation3], 1
    %196 = vsyncpa [#allocation6], 1
    %197 = vsyncpa [#allocation4], 1

</llo_original>
